<compile_context>
chip_gen: v6e
topology: v6e:2x2x1
jax: 0.10.0
libtpu: 0.0.40
codegen_flags: <defaults>
</compile_context>

<pallas_src>
import jax
import jax.numpy as jnp
from jax.experimental import pallas as pl
from jax.experimental.pallas import tpu as pltpu

HIDDEN = 128        # lane-aligned stand-in for hidden_size=300 (pad 300 -> 384 in prod)
SEQ_LEN = 8
TBLK = 8            # timesteps per recurrence grid step (amortizes per-step pipeline overhead)
PROJ_TM_MAX = 256   # row tile of the batched input projection (fills the MXU M dimension)


def _round_up(x, m):
    return ((x + m - 1) // m) * m


def input_proj_kernel(emb_ref, w_ihT_ref, b_ref, gi_ref):
    """gi[t] = x_t @ W_ih^T + (b_ih, with b_hh folded in for the r/z gates).

    Batched over a (tm, H) block of timesteps — no dependence on h, so it runs
    off the serial recurrence path with real MXU occupancy.
    """
    x = emb_ref[...].astype(w_ihT_ref.dtype)   # in-kernel cast (bf16 MXU path; no wrapper cast)
    gi_ref[...] = jnp.dot(x, w_ihT_ref[...],
                          preferred_element_type=jnp.float32) + b_ref[...]


def gru_recur_kernel(gi_ref, h0_ref, w_hhT_ref, b_hhn_ref, out_ref, h_scr):
    """One grid step == TBLK GRU time steps; hidden state carried in VMEM scratch."""
    H = h_scr.shape[-1]
    tblk = out_ref.shape[0]

    @pl.when(pl.program_id(0) == 0)
    def _():
        h_scr[...] = h0_ref[...]

    w_hhT = w_hhT_ref[...]     # (H, 3H) f32, VMEM-resident (constant index_map)
    b_hhn = b_hhn_ref[...]     # (1, H)  f32, bias of the n gate's hidden projection

    def step(t, h):
        # Recurrent half only: (1, H) @ (H, 3H) in f32 (no bf16 rounding of h fed back).
        gh = jnp.dot(h, w_hhT, preferred_element_type=jnp.float32)       # (1, 3H)
        gi = gi_ref[pl.ds(t, 1), :]                                      # (1, 3H), biases folded
        r = jax.nn.sigmoid(gi[:, 0:H] + gh[:, 0:H])
        z = jax.nn.sigmoid(gi[:, H:2 * H] + gh[:, H:2 * H])
        n = jnp.tanh(gi[:, 2 * H:3 * H] + r * (gh[:, 2 * H:3 * H] + b_hhn))
        h_new = (1.0 - z) * n + z * h
        out_ref[pl.ds(t, 1), :] = h_new.astype(out_ref.dtype)            # output == hidden
        return h_new

    h_scr[...] = jax.lax.fori_loop(0, tblk, step, h_scr[...], unroll=True)


def encoder_rnn_sequence(embedded, hidden, params):
    """Run the full GRU recurrence: batched input projection + fused recurrence.

    embedded: (T, H) or (T, 1, H) pre-embedded tokens; hidden: (1, 1, H) or (1, H).
    Returns (outputs (T, 1, H), hidden_T (1, 1, H)).
    """
    H = params["hidden_size"]
    emb = embedded.reshape(-1, H)                 # no wrapper dtype cast (done in-kernel)
    T = emb.shape[0]
    h0 = hidden.reshape(1, H).astype(jnp.float32)

    # Pad T so that both the projection tile and the recurrence block divide it evenly.
    T_pad = _round_up(T, TBLK) if T <= PROJ_TM_MAX else _round_up(T, PROJ_TM_MAX)
    tm = min(T_pad, PROJ_TM_MAX)
    if T_pad != T:
        emb = jnp.pad(emb, ((0, T_pad - T), (0, 0)))

    w_ihT = params["w_ihT"]     # (H, 3H), projection dtype (bf16 default)
    w_hhT = params["w_hhT"]     # (H, 3H), f32 — recurrence stays f32 (no h drift)
    b_proj = params["b_proj"]   # (1, 3H), f32: b_ih (+ b_hh folded in for r/z gates)
    b_hhn = params["b_hh_n"]    # (1, H),  f32: b_hh of the n gate

    # Stage 1: batched input projection over all timesteps (truly parallel axis).
    gi = pl.pallas_call(
        input_proj_kernel,
        out_shape=jax.ShapeDtypeStruct((T_pad, 3 * H), jnp.float32),
        grid=(T_pad // tm,),
        in_specs=[
            pl.BlockSpec((tm, H), lambda i: (i, 0)),        # embedding rows (streamed)
            pl.BlockSpec((H, 3 * H), lambda i: (0, 0)),     # W_ih^T (VMEM-resident)
            pl.BlockSpec((1, 3 * H), lambda i: (0, 0)),     # folded biases
        ],
        out_specs=pl.BlockSpec((tm, 3 * H), lambda i: (i, 0)),
        compiler_params=pltpu.CompilerParams(
            dimension_semantics=("parallel",)),
    )(emb, w_ihT, b_proj)

    # Stage 2: the recurrence, TBLK steps per grid iteration, h carried in VMEM scratch.
    out = pl.pallas_call(
        gru_recur_kernel,
        out_shape=jax.ShapeDtypeStruct((T_pad, H), jnp.float32),
        grid=(T_pad // TBLK,),
        in_specs=[
            pl.BlockSpec((TBLK, 3 * H), lambda b: (b, 0)),  # precomputed gi block (streamed)
            pl.BlockSpec((1, H), lambda b: (0, 0)),         # h0 (read once at block 0)
            pl.BlockSpec((H, 3 * H), lambda b: (0, 0)),     # W_hh^T (VMEM-resident)
            pl.BlockSpec((1, H), lambda b: (0, 0)),         # b_hh_n
        ],
        out_specs=pl.BlockSpec((TBLK, H), lambda b: (b, 0)),
        scratch_shapes=[pltpu.VMEM((1, H), jnp.float32)],   # carried hidden state
        compiler_params=pltpu.CompilerParams(
            dimension_semantics=("arbitrary",)),            # time axis is a recurrence
    )(gi, h0, w_hhT, b_hhn)

    out = out[:T]
    return out.reshape(T, 1, H), out[T - 1].reshape(1, 1, H)


def encoder_rnn_forward(inp, hidden, params):
    """Single-step forward matching EncoderRNN.forward(input, hidden) exactly."""
    H = params["hidden_size"]
    embedded = inp.reshape(1, H)                  # input.view(1, 1, -1)
    outputs, hidden_new = encoder_rnn_sequence(embedded, hidden, params)
    return outputs.reshape(1, 1, H), hidden_new   # output == hidden for a GRU step


def init_params(key, hidden_size, proj_dtype=jnp.bfloat16):
    """PyTorch-style U(-1/sqrt(H), 1/sqrt(H)) init.

    Weights are pre-transposed once; biases are pre-combined: b_ih (all gates)
    plus b_hh for the r/z gates fold into the batched projection bias, and only
    b_hh_n stays separate (it sits inside r * (...)). Projection weights default
    to bf16; recurrent weights stay f32 so the carried h never round-trips
    through bf16.
    """
    H = hidden_size
    k1, k2, k3, k4 = jax.random.split(key, 4)
    bound = 1.0 / float(H) ** 0.5
    w_ih = jax.random.uniform(k1, (3 * H, H), jnp.float32, -bound, bound)
    w_hh = jax.random.uniform(k2, (3 * H, H), jnp.float32, -bound, bound)
    b_ih = jax.random.uniform(k3, (3 * H,), jnp.float32, -bound, bound)
    b_hh = jax.random.uniform(k4, (3 * H,), jnp.float32, -bound, bound)
    b_proj = jnp.concatenate([
        b_ih[0:H] + b_hh[0:H],            # r gate: b_ih_r + b_hh_r
        b_ih[H:2 * H] + b_hh[H:2 * H],    # z gate: b_ih_z + b_hh_z
        b_ih[2 * H:3 * H],                # n gate: b_ih_n only
    ]).reshape(1, 3 * H)
    return {
        "hidden_size": H,
        "w_ih": w_ih, "w_hh": w_hh, "b_ih": b_ih, "b_hh": b_hh,  # for the reference impl
        "w_ihT": jnp.asarray(w_ih.T, dtype=proj_dtype),          # (H, 3H)
        "w_hhT": jnp.asarray(w_hh.T, dtype=jnp.float32),         # (H, 3H) f32 recurrence
        "b_proj": b_proj,                                        # (1, 3H) f32
        "b_hh_n": b_hh[2 * H:3 * H].reshape(1, H),               # (1, H)  f32
    }


def _reference_sequence(embedded, hidden, params, proj_dtype=None):
    """Pure-JAX GRU scan matching torch.nn.GRU (gate order r, z, n)."""
    H = params["hidden_size"]
    w_ih, w_hh = params["w_ih"], params["w_hh"]
    b_ih, b_hh = params["b_ih"], params["b_hh"]
    wi = w_ih if proj_dtype is None else w_ih.astype(proj_dtype)

    def step(h, x):
        xc = x if proj_dtype is None else x.astype(proj_dtype)
        gi = jnp.dot(xc, wi.T, preferred_element_type=jnp.float32) + b_ih
        gh = jnp.dot(h, w_hh.T, preferred_element_type=jnp.float32) + b_hh
        r = jax.nn.sigmoid(gi[:H] + gh[:H])
        z = jax.nn.sigmoid(gi[H:2 * H] + gh[H:2 * H])
        n = jnp.tanh(gi[2 * H:] + r * gh[2 * H:])
        h_new = (1.0 - z) * n + z * h
        return h_new, h_new

    emb = embedded.reshape(-1, H).astype(jnp.float32)
    h0 = hidden.reshape(H).astype(jnp.float32)
    hT, outs = jax.lax.scan(step, h0, emb)
    return outs.reshape(-1, 1, H), hT.reshape(1, 1, H)


if __name__ == "__main__":
    key = jax.random.PRNGKey(0)
    kp, kx = jax.random.split(key, 2)

    emb_seq = jax.random.normal(kx, (SEQ_LEN, HIDDEN), jnp.float32)  # pre-embedded tokens
    hidden0 = jnp.zeros((1, 1, HIDDEN), jnp.float32)                 # initHidden()

    # --- f32 everywhere: tight check of the two-stage kernel ---
    params_f32 = init_params(kp, HIDDEN, proj_dtype=jnp.float32)
    outs, hT = encoder_rnn_sequence(emb_seq, hidden0, params_f32)
    jax.block_until_ready((outs, hT))
    ref_outs, ref_hT = _reference_sequence(emb_seq, hidden0, params_f32)
    assert outs.shape == (SEQ_LEN, 1, HIDDEN) and hT.shape == (1, 1, HIDDEN)
    assert jnp.allclose(outs, ref_outs, atol=1e-4, rtol=1e-4)
    assert jnp.allclose(hT, ref_hT, atol=1e-4, rtol=1e-4)

    # --- T not a multiple of TBLK: exercises the padding path ---
    T5 = 5
    outs5, hT5 = encoder_rnn_sequence(emb_seq[:T5], hidden0, params_f32)
    jax.block_until_ready((outs5, hT5))
    ref_outs5, ref_hT5 = _reference_sequence(emb_seq[:T5], hidden0, params_f32)
    assert outs5.shape == (T5, 1, HIDDEN) and hT5.shape == (1, 1, HIDDEN)
    assert jnp.allclose(outs5, ref_outs5, atol=1e-4, rtol=1e-4)
    assert jnp.allclose(hT5, ref_hT5, atol=1e-4, rtol=1e-4)

    # --- bf16 projection (recurrence stays f32): looser check vs matching reference ---
    params_bf16 = init_params(kp, HIDDEN, proj_dtype=jnp.bfloat16)
    outs_b, hT_b = encoder_rnn_sequence(emb_seq, hidden0, params_bf16)
    jax.block_until_ready((outs_b, hT_b))
    ref_outs_b, ref_hT_b = _reference_sequence(emb_seq, hidden0, params_f32,
                                               proj_dtype=jnp.bfloat16)
    assert jnp.allclose(outs_b, ref_outs_b, atol=2e-3, rtol=2e-3)
    assert jnp.allclose(hT_b, ref_hT_b, atol=2e-3, rtol=2e-3)

    # --- single-step API (exact EncoderRNN.forward(input, hidden) semantics) ---
    out1, h1 = encoder_rnn_forward(emb_seq[0], hidden0, params_f32)
    jax.block_until_ready((out1, h1))
    assert out1.shape == (1, 1, HIDDEN) and h1.shape == (1, 1, HIDDEN)
    assert jnp.allclose(out1, ref_outs[0:1], atol=1e-4, rtol=1e-4)
    assert jnp.allclose(h1, ref_outs[0:1], atol=1e-4, rtol=1e-4)

    print("KERNEL_OK")
</pallas_src>

<mosaic_0001>
module attributes {stable_mosaic.version = 11 : i64} {
  func.func @input_proj_kernel(%arg0: i32, %arg1: memref<8x128xf32, #tpu.memory_space<vmem>>, %arg2: memref<128x384xf32, #tpu.memory_space<vmem>>, %arg3: memref<1x384xf32, #tpu.memory_space<vmem>>, %arg4: memref<8x384xf32, #tpu.memory_space<vmem>>) attributes {dimension_semantics = [#tpu.dimension_semantics<parallel>], iteration_bounds = array<i64: 1>, scalar_prefetch = 0 : i64, scratch_operands = 0 : i64, tpu.core_type = #tpu.core_type<tc>, window_params = [{transform_indices = @transform_0, window_bounds = array<i64: 8, 128>}, {pipeline_mode = #tpu.pipeline_mode<synchronous>, transform_indices = @transform_1, window_bounds = array<i64: 128, 384>}, {pipeline_mode = #tpu.pipeline_mode<synchronous>, transform_indices = @transform_2, window_bounds = array<i64: 1, 384>}, {transform_indices = @transform_3, window_bounds = array<i64: 8, 384>}]} {
    %c0 = arith.constant 0 : index
    %c0_0 = arith.constant 0 : index
    %0 = vector.load %arg1[%c0, %c0_0] : memref<8x128xf32, #tpu.memory_space<vmem>>, vector<8x128xf32>
    %c0_1 = arith.constant 0 : index
    %c0_2 = arith.constant 0 : index
    %1 = vector.load %arg2[%c0_1, %c0_2] : memref<128x384xf32, #tpu.memory_space<vmem>>, vector<128x384xf32>
    %cst = arith.constant dense<0.000000e+00> : vector<8x384xf32>
    %2 = tpu.matmul %0, %1, %cst {dimension_numbers = #tpu.dot_dimension_numbers<[1], [0], [0], [1], [0, 0, 1, 1], [], []>} : vector<8x128xf32>, vector<128x384xf32>, vector<8x384xf32> -> vector<8x384xf32>
    %c0_3 = arith.constant 0 : index
    %c0_4 = arith.constant 0 : index
    %3 = vector.load %arg3[%c0_3, %c0_4] : memref<1x384xf32, #tpu.memory_space<vmem>>, vector<1x384xf32>
    %4 = vector.broadcast %3 : vector<1x384xf32> to vector<8x384xf32>
    %5 = arith.addf %2, %4 : vector<8x384xf32>
    %c0_5 = arith.constant 0 : index
    %c0_6 = arith.constant 0 : index
    %6 = vector.load %arg4[%c0_5, %c0_6] : memref<8x384xf32, #tpu.memory_space<vmem>>, vector<8x384xf32>
    tpu.vector_store %arg4[%c0_5, %c0_6], %5 {strides = array<i32>} : memref<8x384xf32, #tpu.memory_space<vmem>>, vector<8x384xf32>,
    return
  }
  func.func @transform_0(%arg0: i32) -> (i32, i32) {
    %c0_i32 = arith.constant 0 : i32
    %c0_i32_0 = arith.constant 0 : i32
    return %arg0, %c0_i32 : i32, i32
  }
  func.func @transform_1(%arg0: i32) -> (i32, i32) {
    %c0_i32 = arith.constant 0 : i32
    %c0_i32_0 = arith.constant 0 : i32
    %c0_i32_1 = arith.constant 0 : i32
    return %c0_i32, %c0_i32_0 : i32, i32
  }
  func.func @transform_2(%arg0: i32) -> (i32, i32) {
    %c0_i32 = arith.constant 0 : i32
    %c0_i32_0 = arith.constant 0 : i32
    %c0_i32_1 = arith.constant 0 : i32
    return %c0_i32, %c0_i32_0 : i32, i32
  }
  func.func @transform_3(%arg0: i32) -> (i32, i32) {
    %c0_i32 = arith.constant 0 : i32
    %c0_i32_0 = arith.constant 0 : i32
    return %arg0, %c0_i32 : i32, i32
  }
}

</mosaic_0001>

<llo_original>
// kernel: tpu_custom_call.1
$region0: #{tpu_custom_call.1}
  #allocation0 [shape = 'u32[]', space=smem, size = 0x4, offset = 0x4, fixed_abs, tag = 'smem constant byte address 0x4 - core index']
  #allocation1 [shape = 'u32[144,128]{1,0:T(1,128)}', space=vmem, size = 0x12000, scoped, tag = 'internal scratch']
  %s0 = inlined_call_operand.hbm [shape: f32[8,128], index: 0, kind: input, shape index: {}]
  %s1 = inlined_call_operand.hbm [shape: f32[128,384], index: 1, kind: input, shape index: {}]
  %s2 = inlined_call_operand.vmem [shape: f32[1,384], index: 2, kind: input, shape index: {}]
  %s3 = inlined_call_operand.hbm [shape: f32[8,384], index: 3, kind: output, shape index: {}]
  %s4 = sld [smem:[#allocation0]]
  $region30: #{tpu_custom_call.1} parent=0
    _
  %s6 = ssub.s32 1, %s4
  %s7 = scalar_select 0, %s6, %s4
  $region1: #{tpu_custom_call.1} parent=0
    #allocation2 [shape = 'u8[4096]{0}', space=vmem, size = 0x1000, scoped, tag = 'input window, operand 0, single buffered']
    #allocation3 [shape = 's32[1]{0}', space=sflag, size = 0x4, scoped, tag = 'scoped memory for tpu_custom_call.1']
    #allocation4 [shape = 's32[1]{0}', space=sflag, size = 0x4, scoped, tag = 'scoped memory for tpu_custom_call.1']
    #allocation5 [shape = 'u8[196608]{0}', space=vmem, size = 0x30000, scoped, tag = 'input window, operand 1, single buffered']
    #allocation6 [shape = 's32[1]{0}', space=sflag, size = 0x4, scoped, tag = 'scoped memory for tpu_custom_call.1']
    #allocation7 [shape = 'u8[12288]{0}', space=vmem, size = 0x3000, scoped, tag = 'output window, operand 0, single buffered']
    %8 = vsyncpa [#allocation3], 0
    %9 = vsyncpa [#allocation6], 0
    %10 = vsyncpa [#allocation4], 0
    // Predicated region
    $region2: #{tpu_custom_call.1} parent=1 // pred_check
      _
    $region3: #{tpu_custom_call.1} parent=1 // pred_check_branch
      %12 = sbr.rel (0) target = $region5
    $region4: #{tpu_custom_call.1} parent=1 // pred_region
      %s14 = ssub.s32 128, 128
      %15 = vsyncadd [#allocation3], %s14
      %s17 = sshll.u32 [#allocation2], 4
      %s18 = int_to_ptr.vmem [resolvable:$true] %s17
      %20 = dma.hbm_to_vmem [thread:$0]  %s0, 128, %s18, [#allocation3]
    $region5: #{tpu_custom_call.1} parent=1 // pred_fallthru
      _
    // Predicated region
    $region6: #{tpu_custom_call.1} parent=1 // pred_check
      _
    $region7: #{tpu_custom_call.1} parent=1 // pred_check_branch
      %22 = sbr.rel (0) target = $region9
    $region8: #{tpu_custom_call.1} parent=1 // pred_region
      %s24 = ssub.s32 6144, 6144
      %25 = vsyncadd [#allocation6], %s24
      %s26 = sshll.u32 [#allocation5], 4
      %s27 = int_to_ptr.vmem [resolvable:$true] %s26
      %32 = dma.hbm_to_vmem [thread:$0]  %s1, 6144, %s27, [#allocation6], 384, 384, 24
    $region9: #{tpu_custom_call.1} parent=1 // pred_fallthru
      _
    // Predicated region
    $region10: #{tpu_custom_call.1} parent=1 // pred_check
      _
    $region11: #{tpu_custom_call.1} parent=1 // pred_check_branch
      %34 = sbr.rel (0) target = $region13
    $region12: #{tpu_custom_call.1} parent=1 // pred_region
      _
    $region13: #{tpu_custom_call.1} parent=1 // pred_fallthru
      _
    // Predicated region
    $region14: #{tpu_custom_call.1} parent=1 // pred_check
      _
    $region15: #{tpu_custom_call.1} parent=1 // pred_check_branch
      %36 = sbr.rel (0) target = $region17
    $region16: #{tpu_custom_call.1} parent=1 // pred_region
      %37 = dma.done [#allocation3], 128
    $region17: #{tpu_custom_call.1} parent=1 // pred_fallthru
      _
    // Predicated region
    $region18: #{tpu_custom_call.1} parent=1 // pred_check
      _
    $region19: #{tpu_custom_call.1} parent=1 // pred_check_branch
      %39 = sbr.rel (0) target = $region21
    $region20: #{tpu_custom_call.1} parent=1 // pred_region
      %40 = dma.done [#allocation6], 6144
    $region21: #{tpu_custom_call.1} parent=1 // pred_fallthru
      _
    %v41 = vld [vmem:[#allocation2] sm:$0xff]
    %v42 = vld [vmem:[#allocation5] sm:$0xff]
    %v43 = vld [vmem:[#allocation5 + $0x8] sm:$0xff]
    %v44 = vld [vmem:[#allocation5 + $0x10] sm:$0xff]
    %v45 = vld [vmem:[#allocation5 + $0x18] sm:$0xff]
    %v46 = vld [vmem:[#allocation5 + $0x20] sm:$0xff]
    %v47 = vld [vmem:[#allocation5 + $0x28] sm:$0xff]
    %v48 = vld [vmem:[#allocation5 + $0x30] sm:$0xff]
    %v49 = vld [vmem:[#allocation5 + $0x38] sm:$0xff]
    %v50 = vld [vmem:[#allocation5 + $0x40] sm:$0xff]
    %v51 = vld [vmem:[#allocation5 + $0x48] sm:$0xff]
    %v52 = vld [vmem:[#allocation5 + $0x50] sm:$0xff]
    %v53 = vld [vmem:[#allocation5 + $0x58] sm:$0xff]
    %v54 = vld [vmem:[#allocation5 + $0x60] sm:$0xff]
    %v55 = vld [vmem:[#allocation5 + $0x68] sm:$0xff]
    %v56 = vld [vmem:[#allocation5 + $0x70] sm:$0xff]
    %v57 = vld [vmem:[#allocation5 + $0x78] sm:$0xff]
    %v58 = vld [vmem:[#allocation5 + $0x80] sm:$0xff]
    %v59 = vld [vmem:[#allocation5 + $0x88] sm:$0xff]
    %v60 = vld [vmem:[#allocation5 + $0x90] sm:$0xff]
    %v61 = vld [vmem:[#allocation5 + $0x98] sm:$0xff]
    %v62 = vld [vmem:[#allocation5 + $0xa0] sm:$0xff]
    %v63 = vld [vmem:[#allocation5 + $0xa8] sm:$0xff]
    %v64 = vld [vmem:[#allocation5 + $0xb0] sm:$0xff]
    %v65 = vld [vmem:[#allocation5 + $0xb8] sm:$0xff]
    %v66 = vld [vmem:[#allocation5 + $0xc0] sm:$0xff]
    %v67 = vld [vmem:[#allocation5 + $0xc8] sm:$0xff]
    %v68 = vld [vmem:[#allocation5 + $0xd0] sm:$0xff]
    %v69 = vld [vmem:[#allocation5 + $0xd8] sm:$0xff]
    %v70 = vld [vmem:[#allocation5 + $0xe0] sm:$0xff]
    %v71 = vld [vmem:[#allocation5 + $0xe8] sm:$0xff]
    %v72 = vld [vmem:[#allocation5 + $0xf0] sm:$0xff]
    %v73 = vld [vmem:[#allocation5 + $0xf8] sm:$0xff]
    %v74 = vld [vmem:[#allocation5 + $0x100] sm:$0xff]
    %v75 = vld [vmem:[#allocation5 + $0x108] sm:$0xff]
    %v76 = vld [vmem:[#allocation5 + $0x110] sm:$0xff]
    %v77 = vld [vmem:[#allocation5 + $0x118] sm:$0xff]
    %v78 = vld [vmem:[#allocation5 + $0x120] sm:$0xff]
    %v79 = vld [vmem:[#allocation5 + $0x128] sm:$0xff]
    %v80 = vld [vmem:[#allocation5 + $0x130] sm:$0xff]
    %v81 = vld [vmem:[#allocation5 + $0x138] sm:$0xff]
    %v82 = vld [vmem:[#allocation5 + $0x140] sm:$0xff]
    %v83 = vld [vmem:[#allocation5 + $0x148] sm:$0xff]
    %v84 = vld [vmem:[#allocation5 + $0x150] sm:$0xff]
    %v85 = vld [vmem:[#allocation5 + $0x158] sm:$0xff]
    %v86 = vld [vmem:[#allocation5 + $0x160] sm:$0xff]
    %v87 = vld [vmem:[#allocation5 + $0x168] sm:$0xff]
    %v88 = vld [vmem:[#allocation5 + $0x170] sm:$0xff]
    %v89 = vld [vmem:[#allocation5 + $0x178] sm:$0xff]
    %v90 = vld [vmem:[%s2] sm:$0x7]
    %v92 = vlaneseq
    %v93 = vshrl.u32 %v92, 7
    %v94 = vsub.s32 0, %v93
    %v95 = vrot.slane %v90, %v94
    %v96 = vlaneseq
    %v97 = vshrl.u32 %v96, 7
    %v98 = vsub.s32 1, %v97
    %v99 = vrot.slane %v90, %v98
    %v100 = vlaneseq
    %v101 = vshrl.u32 %v100, 7
    %v102 = vsub.s32 2, %v101
    %v103 = vrot.slane %v90, %v102
    %107 = vmatprep.subr.mxu0 %v88
    %108 = vmatpush1.msra.mxu0 %v87
    %109 = vmatprep.subr.mxu0 %v85
    %110 = vmatpush1.msra.mxu0 %v84
    %111 = vmatprep.subr.mxu0 %v82
    %112 = vmatpush1.msra.mxu0 %v81
    %113 = vmatprep.subr.mxu0 %v79
    %114 = vmatpush1.msra.mxu0 %v78
    %115 = vmatprep.subr.mxu0 %v76
    %116 = vmatpush1.msra.mxu0 %v75
    %117 = vmatprep.subr.mxu0 %v73
    %118 = vmatpush1.msra.mxu0 %v72
    %119 = vmatprep.subr.mxu0 %v70
    %120 = vmatpush1.msra.mxu0 %v69
    %121 = vmatprep.subr.mxu0 %v67
    %122 = vmatpush1.msra.mxu0 %v66
    %123 = vmatprep.subr.mxu0 %v64
    %124 = vmatpush1.msra.mxu0 %v63
    %125 = vmatprep.subr.mxu0 %v61
    %126 = vmatpush1.msra.mxu0 %v60
    %127 = vmatprep.subr.mxu0 %v58
    %128 = vmatpush1.msra.mxu0 %v57
    %129 = vmatprep.subr.mxu0 %v55
    %130 = vmatpush1.msra.mxu0 %v54
    %131 = vmatprep.subr.mxu0 %v52
    %132 = vmatpush1.msra.mxu0 %v51
    %133 = vmatprep.subr.mxu0 %v49
    %134 = vmatpush1.msra.mxu0 %v48
    %135 = vmatprep.subr.mxu0 %v46
    %136 = vmatpush1.msra.mxu0 %v45
    %137 = vmatprep.subr.mxu0 %v43
    %138 = vmatpush1.msra.mxu0 %v42
    %139 = vmatprep.subr.mxu0 0.0
    %140 = vmatpush2.msra.mxu0 0.0
    %141 = vmatprep.subr.mxu0 0.0
    %142 = vmatpush2.msra.mxu0 0.0
    %143 = vmatprep.subr.mxu0 0.0
    %144 = vmatpush2.msra.mxu0 0.0
    %145 = vmatprep.subr.mxu0 0.0
    %146 = vmatpush2.msra.mxu0 0.0
    %147 = vmatprep.subr.mxu0 0.0
    %148 = vmatpush2.msra.mxu0 0.0
    %149 = vmatprep.subr.mxu0 0.0
    %150 = vmatpush2.msra.mxu0 0.0
    %151 = vmatprep.subr.mxu0 0.0
    %152 = vmatpush2.msra.mxu0 0.0
    %153 = vmatprep.subr.mxu0 0.0
    %154 = vmatpush2.msra.mxu0 0.0
    %155 = vmatprep.subr.mxu0 0.0
    %156 = vmatpush2.msra.mxu0 0.0
    %157 = vmatprep.subr.mxu0 0.0
    %158 = vmatpush2.msra.mxu0 0.0
    %159 = vmatprep.subr.mxu0 0.0
    %160 = vmatpush2.msra.mxu0 0.0
    %161 = vmatprep.subr.mxu0 0.0
    %162 = vmatpush2.msra.mxu0 0.0
    %163 = vmatprep.subr.mxu0 0.0
    %164 = vmatpush2.msra.mxu0 0.0
    %165 = vmatprep.subr.mxu0 0.0
    %166 = vmatpush2.msra.mxu0 0.0
    %167 = vmatprep.subr.mxu0 0.0
    %168 = vmatpush2.msra.mxu0 0.0
    %169 = vmatprep.subr.mxu0 0.0
    %170 = vmatpush2.msra.mxu0 0.0
    %171 = vmatprep.mubr.f32.mxu0 0.0
    %172 = vmatmul.mubr.f32.gmra.mxu0 %v41
    %v173 = vpop.f32.mrf.mxu0
    %v174 = vadd.f32 %v95, %v173
    %v175 = vpop.f32.mrf.mxu0
    %v176 = vadd.f32 %v99, %v175
    %177 = vdwg.mxu0
    %178 = vmatprep.subr.mxu0 0.0
    %179 = vmatpush1.msra.mxu0 %v89
    %180 = vmatprep.subr.mxu0 0.0
    %181 = vmatpush1.msra.mxu0 %v86
    %182 = vmatprep.subr.mxu0 0.0
    %183 = vmatpush1.msra.mxu0 %v83
    %184 = vmatprep.subr.mxu0 0.0
    %185 = vmatpush1.msra.mxu0 %v80
    %186 = vmatprep.subr.mxu0 0.0
    %187 = vmatpush1.msra.mxu0 %v77
    %188 = vmatprep.subr.mxu0 0.0
    %189 = vmatpush1.msra.mxu0 %v74
    %190 = vmatprep.subr.mxu0 0.0
    %191 = vmatpush1.msra.mxu0 %v71
    %192 = vmatprep.subr.mxu0 0.0
    %193 = vmatpush1.msra.mxu0 %v68
    %194 = vmatprep.subr.mxu0 0.0
    %195 = vmatpush1.msra.mxu0 %v65
    %196 = vmatprep.subr.mxu0 0.0
    %197 = vmatpush1.msra.mxu0 %v62
    %198 = vmatprep.subr.mxu0 0.0
    %199 = vmatpush1.msra.mxu0 %v59
    %200 = vmatprep.subr.mxu0 0.0
    %201 = vmatpush1.msra.mxu0 %v56
    %202 = vmatprep.subr.mxu0 0.0
    %203 = vmatpush1.msra.mxu0 %v53
    %204 = vmatprep.subr.mxu0 0.0
    %205 = vmatpush1.msra.mxu0 %v50
    %206 = vmatprep.subr.mxu0 0.0
    %207 = vmatpush1.msra.mxu0 %v47
    %208 = vmatprep.subr.mxu0 0.0
    %209 = vmatpush1.msra.mxu0 %v44
    %210 = vmatprep.subr.mxu0 0.0
    %211 = vmatpush2.msra.mxu0 0.0
    %212 = vmatprep.subr.mxu0 0.0
    %213 = vmatpush2.msra.mxu0 0.0
    %214 = vmatprep.subr.mxu0 0.0
    %215 = vmatpush2.msra.mxu0 0.0
    %216 = vmatprep.subr.mxu0 0.0
    %217 = vmatpush2.msra.mxu0 0.0
    %218 = vmatprep.subr.mxu0 0.0
    %219 = vmatpush2.msra.mxu0 0.0
    %220 = vmatprep.subr.mxu0 0.0
    %221 = vmatpush2.msra.mxu0 0.0
    %222 = vmatprep.subr.mxu0 0.0
    %223 = vmatpush2.msra.mxu0 0.0
    %224 = vmatprep.subr.mxu0 0.0
    %225 = vmatpush2.msra.mxu0 0.0
    %226 = vmatprep.subr.mxu0 0.0
    %227 = vmatpush2.msra.mxu0 0.0
    %228 = vmatprep.subr.mxu0 0.0
    %229 = vmatpush2.msra.mxu0 0.0
    %230 = vmatprep.subr.mxu0 0.0
    %231 = vmatpush2.msra.mxu0 0.0
    %232 = vmatprep.subr.mxu0 0.0
    %233 = vmatpush2.msra.mxu0 0.0
    %234 = vmatprep.subr.mxu0 0.0
    %235 = vmatpush2.msra.mxu0 0.0
    %236 = vmatprep.subr.mxu0 0.0
    %237 = vmatpush2.msra.mxu0 0.0
    %238 = vmatprep.subr.mxu0 0.0
    %239 = vmatpush2.msra.mxu0 0.0
    %240 = vmatprep.subr.mxu0 0.0
    %241 = vmatpush2.msra.mxu0 0.0
    %242 = vmatprep.mubr.f32.mxu0 0.0
    %243 = vmatmul.mubr.f32.gmra.mxu0 %v41
    %v244 = vpop.f32.mrf.mxu0
    %v245 = vadd.f32 %v103, %v244
    %v246 = vpop.f32.mrf.mxu0
    %247 = vdwg.mxu0
    %248 = vst [vmem:[#allocation7] sm:$0xff] %v174
    %249 = vst [vmem:[#allocation7 + $0x8] sm:$0xff] %v176
    %250 = vst [vmem:[#allocation7 + $0x10] sm:$0xff] %v245
    // Predicated region
    $region22: #{tpu_custom_call.1} parent=1 // pred_check
      _
    $region23: #{tpu_custom_call.1} parent=1 // pred_check_branch
      %252 = sbr.rel (0) target = $region25
    $region24: #{tpu_custom_call.1} parent=1 // pred_region
      %s254 = ssub.s32 384, 384
      %255 = vsyncadd [#allocation4], %s254
      %s257 = sshll.u32 [#allocation7], 4
      %s258 = int_to_ptr.vmem [resolvable:$true] %s257
      %260 = dma.vmem_to_hbm [thread:$0]  %s258, 384, %s3, [#allocation4]
    $region25: #{tpu_custom_call.1} parent=1 // pred_fallthru
      _
    // Predicated region
    $region26: #{tpu_custom_call.1} parent=1 // pred_check
      _
    $region27: #{tpu_custom_call.1} parent=1 // pred_check_branch
      %262 = sbr.rel (0) target = $region29
    $region28: #{tpu_custom_call.1} parent=1 // pred_region
      %263 = dma.done [#allocation4], 384
    $region29: #{tpu_custom_call.1} parent=1 // pred_fallthru
      _
    %264 = vsyncpa [#allocation3], 1
    %265 = vsyncpa [#allocation6], 1
    %266 = vsyncpa [#allocation4], 1

</llo_original>
